<compile_context>
chip_gen: v5e
topology: v5e:2x2
jax: 0.10.0
libtpu: 0.0.40
codegen_flags: <defaults>
</compile_context>

<pallas_src>
import jax
import jax.numpy as jnp
from jax import lax
from jax.experimental import pallas as pl
from jax.experimental.pallas import tpu as pltpu


def _gnn_kernel(x_ref, gcat_ref, scat_ref, ew_ref, w1s_ref, w1t_ref, w1w_ref,
                b1_ref, w2_ref, b2_ref, w3_ref, b3_ref, out_ref,
                psrc_ref, ptgt_ref, agg_ref):
    """One grid step processes bb = rows // N batch elements.

    x_ref    : [bb*N, in_dim]   node features (batch flattened into rows)
    gcat_ref : [E, 2N]  [onehot(src) | onehot(tgt)]              (bf16, exact)
    scat_ref : [N, E]   (onehot_tgt - onehot_src)^T               (bf16, exact)
    ew_ref   : [E, 1]   edge weights (f32)
    w1s/w1t  : [in_dim, e_h]  split edge-MLP layer-1 weights (src / tgt halves)
    w1w, b1  : [1, e_h]       edge-weight column of w1, layer-1 bias
    w2, b2   : [e_h, e_out_pad], [1, e_out_pad]
    w3, b3   : [e_out_pad, n_out_pad], [1, n_out_pad]  (zero-padded, lane-dense)
    out_ref  : [bb*N, n_out_pad]
    scratch  : psrc/ptgt [bb*N, e_h] bf16, agg [bb*N, e_out_pad] f32
    """
    rows, _ = x_ref.shape
    n_nodes = scat_ref.shape[0]
    bb = rows // n_nodes

    # Edge bias computed in-kernel (saves an [E, e_h] f32 HBM operand):
    #   edge_weight * w1_w + b1  -> [E, e_h]
    ebias = ew_ref[...] * w1w_ref[...] + b1_ref[...]

    # Batched node-side projections: one MXU dot each over ALL bb*N rows
    # (the [B, E, 2*in_dim+1] edge concat of the reference never exists).
    x_flat = x_ref[...]
    psrc_ref[...] = jnp.dot(x_flat, w1s_ref[...],
                            preferred_element_type=jnp.float32).astype(jnp.bfloat16)
    ptgt_ref[...] = jnp.dot(x_flat, w1t_ref[...],
                            preferred_element_type=jnp.float32).astype(jnp.bfloat16)

    # Graph operators / edge-MLP weights loaded once, reused across the batch loop.
    gcat = gcat_ref[...]          # [E, 2N]  bf16
    scat = scat_ref[...]          # [N, E]   bf16
    w2 = w2_ref[...]
    b2 = b2_ref[...]

    def body(b, carry):
        row = pl.multiple_of(b * n_nodes, n_nodes)
        # Fused gather: one bf16 x bf16 MXU dot over a 2N-deep contraction.
        p_cat = jnp.concatenate(
            [psrc_ref[pl.ds(row, n_nodes), :],
             ptgt_ref[pl.ds(row, n_nodes), :]], axis=0)                 # [2N, e_h] bf16
        h = jnp.dot(gcat, p_cat, preferred_element_type=jnp.float32)    # [E, e_h] f32
        h = jax.nn.sigmoid(h + ebias)
        # Edge-MLP layer 2 (tiny; kept f32 for accuracy).
        e = jax.nn.sigmoid(jnp.dot(h, w2, preferred_element_type=jnp.float32) + b2)
        # scatter_add(+e, tgt) + scatter_add(-e, src) == scat @ e (one MXU dot).
        # TODO(synk): at production E, tile this as an "arbitrary" grid axis
        # with a VMEM accumulator (sized for v7x's 64 MiB VMEM).
        agg_ref[pl.ds(row, n_nodes), :] = jnp.dot(
            scat, e.astype(jnp.bfloat16), preferred_element_type=jnp.float32)
        return carry

    lax.fori_loop(0, bb, body, 0, unroll=True)

    # Batched node MLP over all rows; w3/b3 zero-padded to a lane-dense width,
    # so this is a single unmasked 128-lane-wide output store.
    o = jnp.dot(agg_ref[...], w3_ref[...], preferred_element_type=jnp.float32)
    out_ref[...] = jax.nn.sigmoid(o + b3_ref[...])


def build_graph_operators(edge_src_target, num_nodes):
    """Hoisted out of the forward path: the edge list is static across calls.

    Returns the fused gather matrix g_cat = [onehot(src) | onehot(tgt)] of
    shape [E, 2N] and the scatter matrix (onehot_tgt - onehot_src)^T of shape
    [N, E].  All values are exactly representable in bfloat16 (0 / +-1), which
    halves HBM/VMEM traffic and feeds the MXU at its native bf16 rate.
    """
    edge_src = edge_src_target[0]
    edge_tgt = edge_src_target[1]
    node_ids = jnp.arange(num_nodes, dtype=edge_src.dtype)
    onehot_s = (edge_src[:, None] == node_ids[None, :]).astype(jnp.float32)  # [E, N]
    onehot_t = (edge_tgt[:, None] == node_ids[None, :]).astype(jnp.float32)  # [E, N]
    g_cat = jnp.concatenate([onehot_s, onehot_t], axis=1).astype(jnp.bfloat16)  # [E, 2N]
    scat = (onehot_t - onehot_s).T.astype(jnp.bfloat16)                         # [N, E]
    return g_cat, scat


def _num_batch_splits(batch):
    """2-way batch split only on dual-TensorCore chips (v7x); 1 step elsewhere."""
    try:
        kind = jax.devices()[0].device_kind.lower()
    except Exception:
        return 1
    if batch >= 2 and batch % 2 == 0 and ("v7" in kind or "7x" in kind):
        return 2
    return 1


def _round_up(x, m):
    return ((x + m - 1) // m) * m


def graph_gnn_forward(x, edge_weight, graph_ops, params):
    """x: [B, N, in_dim] f32, edge_weight: [E] f32, graph_ops from build_graph_operators."""
    g_cat, scat = graph_ops
    w1, b1, w2, b2, w3, b3 = params
    B, N, in_dim = x.shape
    E = edge_weight.shape[0]
    e_h = w1.shape[1]
    e_out = w2.shape[1]
    n_out = w3.shape[1]

    # Split edge-MLP layer-1 weights so node features are projected on
    # [B*N, in_dim] rows instead of materializing the [B, E, 2*in_dim+1] concat.
    w1_src = w1[:in_dim]                       # [in_dim, e_h]
    w1_tgt = w1[in_dim:2 * in_dim]             # [in_dim, e_h]
    w1_w = w1[2 * in_dim:]                     # [1, e_h]

    # Alignment padding (host-side, zeros => exact):
    #  - e_out -> multiple of 8 (sublane-aligned w3 contraction); padded w3
    #    rows are zero so padded e-columns contribute nothing.
    #  - n_out -> multiple of 128 (lane-dense, unmasked output store); padded
    #    output columns are sliced away below.
    e_out_pad = _round_up(e_out, 8)
    n_out_pad = _round_up(n_out, 128)
    w2_p = jnp.pad(w2, ((0, 0), (0, e_out_pad - e_out)))
    b2_p = jnp.pad(b2, ((0, 0), (0, e_out_pad - e_out)))
    w3_p = jnp.pad(w3, ((0, e_out_pad - e_out), (0, n_out_pad - n_out)))
    b3_p = jnp.pad(b3, ((0, 0), (0, n_out_pad - n_out)))

    n_splits = _num_batch_splits(B)
    bb = B // n_splits
    rows_per_step = bb * N

    x_flat = x.astype(jnp.float32).reshape(B * N, in_dim)     # batch folded into rows
    ew_col = edge_weight.astype(jnp.float32).reshape(E, 1)

    out_flat = pl.pallas_call(
        _gnn_kernel,
        out_shape=jax.ShapeDtypeStruct((B * N, n_out_pad), jnp.float32),
        grid=(n_splits,),
        in_specs=[
            pl.BlockSpec((rows_per_step, in_dim), lambda i: (i, 0)),   # x (batch-split)
            pl.BlockSpec((E, 2 * N), lambda i: (0, 0)),                # g_cat
            pl.BlockSpec((N, E), lambda i: (0, 0)),                    # scat
            pl.BlockSpec((E, 1), lambda i: (0, 0)),                    # edge_weight col
            pl.BlockSpec((in_dim, e_h), lambda i: (0, 0)),             # w1_src
            pl.BlockSpec((in_dim, e_h), lambda i: (0, 0)),             # w1_tgt
            pl.BlockSpec((1, e_h), lambda i: (0, 0)),                  # w1_w
            pl.BlockSpec((1, e_h), lambda i: (0, 0)),                  # b1
            pl.BlockSpec((e_h, e_out_pad), lambda i: (0, 0)),          # w2 (padded)
            pl.BlockSpec((1, e_out_pad), lambda i: (0, 0)),            # b2 (padded)
            pl.BlockSpec((e_out_pad, n_out_pad), lambda i: (0, 0)),    # w3 (padded)
            pl.BlockSpec((1, n_out_pad), lambda i: (0, 0)),            # b3 (padded)
        ],
        out_specs=pl.BlockSpec((rows_per_step, n_out_pad), lambda i: (i, 0)),
        scratch_shapes=[
            pltpu.VMEM((rows_per_step, e_h), jnp.bfloat16),            # p_src
            pltpu.VMEM((rows_per_step, e_h), jnp.bfloat16),            # p_tgt
            pltpu.VMEM((rows_per_step, e_out_pad), jnp.float32),       # agg
        ],
        compiler_params=pltpu.CompilerParams(
            dimension_semantics=("parallel",)),
    )(x_flat, g_cat, scat, ew_col, w1_src, w1_tgt, w1_w, b1, w2_p, b2_p, w3_p, b3_p)

    return out_flat[:, :n_out].reshape(B, N, n_out)


def _reference_forward(x, edge_src_target, edge_weight, params):
    """Pure-JAX reference mirroring the PyTorch forward exactly (f32)."""
    w1, b1, w2, b2, w3, b3 = params
    edge_src = edge_src_target[0]
    edge_target = edge_src_target[1]
    B, N, _ = x.shape
    node_src = x[:, edge_src]
    node_tgt = x[:, edge_target]
    edge_w = jnp.broadcast_to(edge_weight[None, :, None], (B, edge_weight.shape[0], 1))
    out = jnp.concatenate([node_src, node_tgt, edge_w], axis=-1)
    out = jax.nn.sigmoid(out @ w1 + b1[0])
    out = jax.nn.sigmoid(out @ w2 + b2[0])
    out_add = jax.ops.segment_sum(
        jnp.moveaxis(out, 1, 0), edge_target, num_segments=N)
    out_sub = jax.ops.segment_sum(
        jnp.moveaxis(-out, 1, 0), edge_src, num_segments=N)
    agg = jnp.moveaxis(out_add + out_sub, 0, 1)
    return jax.nn.sigmoid(agg @ w3 + b3[0])


if __name__ == "__main__":
    key = jax.random.PRNGKey(0)
    B, N, E = 2, 8, 16
    in_dim, out_dim = 4, 8
    e_h, e_out = 32, 30
    din = 2 * in_dim + 1

    ks = jax.random.split(key, 10)
    x = jax.random.normal(ks[0], (B, N, in_dim), dtype=jnp.float32)
    edge_src = jax.random.randint(ks[1], (E,), 0, N, dtype=jnp.int32)
    edge_target = jax.random.randint(ks[2], (E,), 0, N, dtype=jnp.int32)
    edge_src_target = jnp.stack([edge_src, edge_target], axis=0)   # [2, E]
    edge_weight = jax.random.uniform(ks[3], (E,), dtype=jnp.float32)

    # Deterministic synthetic parameters (PyTorch Linear shapes, stored as [in, out]).
    scale = 0.2
    w1 = scale * jax.random.normal(ks[4], (din, e_h), dtype=jnp.float32)
    b1 = scale * jax.random.normal(ks[5], (1, e_h), dtype=jnp.float32)
    w2 = scale * jax.random.normal(ks[6], (e_h, e_out), dtype=jnp.float32)
    b2 = scale * jax.random.normal(ks[7], (1, e_out), dtype=jnp.float32)
    w3 = scale * jax.random.normal(ks[8], (e_out, out_dim), dtype=jnp.float32)
    b3 = scale * jax.random.normal(ks[9], (1, out_dim), dtype=jnp.float32)
    params = (w1, b1, w2, b2, w3, b3)

    # Graph operators depend only on the (static) edge list: build once, reuse.
    graph_ops = build_graph_operators(edge_src_target, N)

    out = graph_gnn_forward(x, edge_weight, graph_ops, params)
    out = jax.block_until_ready(out)

    ref = _reference_forward(x, edge_src_target, edge_weight, params)
    assert out.shape == (B, N, out_dim)
    # Tolerance relaxed vs the f32 version: the gather/scatter MXU dots now run
    # with bf16 activations (graph operators are exact 0/+-1 in bf16).
    assert jnp.allclose(out, ref, atol=2e-2, rtol=2e-2), "mismatch vs reference"

    print("KERNEL_OK")
</pallas_src>

<mosaic_0001>
module attributes {stable_mosaic.version = 11 : i64} {
  func.func @_gnn_kernel(%arg0: i32, %arg1: memref<16x4xf32, #tpu.memory_space<vmem>>, %arg2: memref<16x16xbf16, #tpu.memory_space<vmem>>, %arg3: memref<8x16xbf16, #tpu.memory_space<vmem>>, %arg4: memref<16x1xf32, #tpu.memory_space<vmem>>, %arg5: memref<4x32xf32, #tpu.memory_space<vmem>>, %arg6: memref<4x32xf32, #tpu.memory_space<vmem>>, %arg7: memref<1x32xf32, #tpu.memory_space<vmem>>, %arg8: memref<1x32xf32, #tpu.memory_space<vmem>>, %arg9: memref<32x32xf32, #tpu.memory_space<vmem>>, %arg10: memref<1x32xf32, #tpu.memory_space<vmem>>, %arg11: memref<32x128xf32, #tpu.memory_space<vmem>>, %arg12: memref<1x128xf32, #tpu.memory_space<vmem>>, %arg13: memref<16x128xf32, #tpu.memory_space<vmem>>, %arg14: memref<16x32xbf16, #tpu.memory_space<vmem>>, %arg15: memref<16x32xbf16, #tpu.memory_space<vmem>>, %arg16: memref<16x32xf32, #tpu.memory_space<vmem>>) attributes {dimension_semantics = [#tpu.dimension_semantics<parallel>], iteration_bounds = array<i64: 1>, scalar_prefetch = 0 : i64, scratch_operands = 3 : i64, tpu.core_type = #tpu.core_type<tc>, window_params = [{transform_indices = @transform_0, window_bounds = array<i64: 16, 4>}, {pipeline_mode = #tpu.pipeline_mode<synchronous>, transform_indices = @transform_1, window_bounds = array<i64: 16, 16>}, {pipeline_mode = #tpu.pipeline_mode<synchronous>, transform_indices = @transform_2, window_bounds = array<i64: 8, 16>}, {pipeline_mode = #tpu.pipeline_mode<synchronous>, transform_indices = @transform_3, window_bounds = array<i64: 16, 1>}, {pipeline_mode = #tpu.pipeline_mode<synchronous>, transform_indices = @transform_4, window_bounds = array<i64: 4, 32>}, {pipeline_mode = #tpu.pipeline_mode<synchronous>, transform_indices = @transform_5, window_bounds = array<i64: 4, 32>}, {pipeline_mode = #tpu.pipeline_mode<synchronous>, transform_indices = @transform_6, window_bounds = array<i64: 1, 32>}, {pipeline_mode = #tpu.pipeline_mode<synchronous>, transform_indices = @transform_7, window_bounds = array<i64: 1, 32>}, {pipeline_mode = #tpu.pipeline_mode<synchronous>, transform_indices = @transform_8, window_bounds = array<i64: 32, 32>}, {pipeline_mode = #tpu.pipeline_mode<synchronous>, transform_indices = @transform_9, window_bounds = array<i64: 1, 32>}, {pipeline_mode = #tpu.pipeline_mode<synchronous>, transform_indices = @transform_10, window_bounds = array<i64: 32, 128>}, {pipeline_mode = #tpu.pipeline_mode<synchronous>, transform_indices = @transform_11, window_bounds = array<i64: 1, 128>}, {transform_indices = @transform_12, window_bounds = array<i64: 16, 128>}]} {
    %c0 = arith.constant 0 : index
    %c0_0 = arith.constant 0 : index
    %0 = vector.load %arg4[%c0, %c0_0] : memref<16x1xf32, #tpu.memory_space<vmem>>, vector<16x1xf32>
    %c0_1 = arith.constant 0 : index
    %c0_2 = arith.constant 0 : index
    %1 = vector.load %arg7[%c0_1, %c0_2] : memref<1x32xf32, #tpu.memory_space<vmem>>, vector<1x32xf32>
    %2 = vector.broadcast %0 : vector<16x1xf32> to vector<16x32xf32>
    %3 = vector.broadcast %1 : vector<1x32xf32> to vector<16x32xf32>
    %4 = arith.mulf %2, %3 : vector<16x32xf32>
    %c0_3 = arith.constant 0 : index
    %c0_4 = arith.constant 0 : index
    %5 = vector.load %arg8[%c0_3, %c0_4] : memref<1x32xf32, #tpu.memory_space<vmem>>, vector<1x32xf32>
    %6 = vector.broadcast %5 : vector<1x32xf32> to vector<16x32xf32>
    %7 = arith.addf %4, %6 : vector<16x32xf32>
    %c0_5 = arith.constant 0 : index
    %c0_6 = arith.constant 0 : index
    %8 = vector.load %arg1[%c0_5, %c0_6] : memref<16x4xf32, #tpu.memory_space<vmem>>, vector<16x4xf32>
    %c0_7 = arith.constant 0 : index
    %c0_8 = arith.constant 0 : index
    %9 = vector.load %arg5[%c0_7, %c0_8] : memref<4x32xf32, #tpu.memory_space<vmem>>, vector<4x32xf32>
    %cst = arith.constant dense<0.000000e+00> : vector<16x32xf32>
    %10 = tpu.matmul %8, %9, %cst {dimension_numbers = #tpu.dot_dimension_numbers<[1], [0], [0], [1], [0, 0, 1, 1], [], []>} : vector<16x4xf32>, vector<4x32xf32>, vector<16x32xf32> -> vector<16x32xf32>
    %11 = arith.truncf %10 : vector<16x32xf32> to vector<16x32xbf16>
    %c0_9 = arith.constant 0 : index
    %c0_10 = arith.constant 0 : index
    %12 = vector.load %arg14[%c0_9, %c0_10] : memref<16x32xbf16, #tpu.memory_space<vmem>>, vector<16x32xbf16>
    tpu.vector_store %arg14[%c0_9, %c0_10], %11 {strides = array<i32>} : memref<16x32xbf16, #tpu.memory_space<vmem>>, vector<16x32xbf16>,
    %c0_11 = arith.constant 0 : index
    %c0_12 = arith.constant 0 : index
    %13 = vector.load %arg6[%c0_11, %c0_12] : memref<4x32xf32, #tpu.memory_space<vmem>>, vector<4x32xf32>
    %cst_13 = arith.constant dense<0.000000e+00> : vector<16x32xf32>
    %14 = tpu.matmul %8, %13, %cst_13 {dimension_numbers = #tpu.dot_dimension_numbers<[1], [0], [0], [1], [0, 0, 1, 1], [], []>} : vector<16x4xf32>, vector<4x32xf32>, vector<16x32xf32> -> vector<16x32xf32>
    %15 = arith.truncf %14 : vector<16x32xf32> to vector<16x32xbf16>
    %c0_14 = arith.constant 0 : index
    %c0_15 = arith.constant 0 : index
    %16 = vector.load %arg15[%c0_14, %c0_15] : memref<16x32xbf16, #tpu.memory_space<vmem>>, vector<16x32xbf16>
    tpu.vector_store %arg15[%c0_14, %c0_15], %15 {strides = array<i32>} : memref<16x32xbf16, #tpu.memory_space<vmem>>, vector<16x32xbf16>,
    %c0_16 = arith.constant 0 : index
    %c0_17 = arith.constant 0 : index
    %17 = vector.load %arg2[%c0_16, %c0_17] : memref<16x16xbf16, #tpu.memory_space<vmem>>, vector<16x16xbf16>
    %c0_18 = arith.constant 0 : index
    %c0_19 = arith.constant 0 : index
    %18 = vector.load %arg3[%c0_18, %c0_19] : memref<8x16xbf16, #tpu.memory_space<vmem>>, vector<8x16xbf16>
    %c0_20 = arith.constant 0 : index
    %c0_21 = arith.constant 0 : index
    %19 = vector.load %arg9[%c0_20, %c0_21] : memref<32x32xf32, #tpu.memory_space<vmem>>, vector<32x32xf32>
    %c0_22 = arith.constant 0 : index
    %c0_23 = arith.constant 0 : index
    %20 = vector.load %arg10[%c0_22, %c0_23] : memref<1x32xf32, #tpu.memory_space<vmem>>, vector<1x32xf32>
    %c0_i32 = arith.constant 0 : i32
    %c8_i32 = arith.constant 8 : i32
    %21 = arith.muli %c0_i32, %c8_i32 : i32
    %22 = tpu.assume_multiple %21, 8 : i32
    %23 = arith.index_cast %22 : i32 to index
    %c0_24 = arith.constant 0 : index
    %24 = vector.load %arg14[%23, %c0_24] : memref<16x32xbf16, #tpu.memory_space<vmem>>, vector<8x32xbf16>
    %25 = arith.index_cast %22 : i32 to index
    %c0_25 = arith.constant 0 : index
    %26 = vector.load %arg15[%25, %c0_25] : memref<16x32xbf16, #tpu.memory_space<vmem>>, vector<8x32xbf16>
    %27 = tpu.concatenate %24, %26 in 0 : vector<8x32xbf16>, vector<8x32xbf16> -> vector<16x32xbf16>
    %cst_26 = arith.constant dense<0.000000e+00> : vector<16x32xf32>
    %28 = tpu.matmul %17, %27, %cst_26 {dimension_numbers = #tpu.dot_dimension_numbers<[1], [0], [0], [1], [0, 0, 1, 1], [], []>} : vector<16x16xbf16>, vector<16x32xbf16>, vector<16x32xf32> -> vector<16x32xf32>
    %29 = arith.addf %28, %7 : vector<16x32xf32>
    %30 = arith.negf %29 : vector<16x32xf32>
    %31 = math.exp %30 : vector<16x32xf32>
    %cst_27 = arith.constant 1.000000e+00 : f32
    %32 = vector.broadcast %cst_27 : f32 to vector<16x32xf32>
    %33 = arith.addf %32, %31 : vector<16x32xf32>
    %34 = arith.divf %32, %33 : vector<16x32xf32>
    %cst_28 = arith.constant dense<0.000000e+00> : vector<16x32xf32>
    %35 = tpu.matmul %34, %19, %cst_28 {dimension_numbers = #tpu.dot_dimension_numbers<[1], [0], [0], [1], [0, 0, 1, 1], [], []>} : vector<16x32xf32>, vector<32x32xf32>, vector<16x32xf32> -> vector<16x32xf32>
    %36 = vector.broadcast %20 : vector<1x32xf32> to vector<16x32xf32>
    %37 = arith.addf %35, %36 : vector<16x32xf32>
    %38 = arith.negf %37 : vector<16x32xf32>
    %39 = math.exp %38 : vector<16x32xf32>
    %cst_29 = arith.constant 1.000000e+00 : f32
    %40 = vector.broadcast %cst_29 : f32 to vector<16x32xf32>
    %41 = arith.addf %40, %39 : vector<16x32xf32>
    %42 = arith.divf %40, %41 : vector<16x32xf32>
    %43 = arith.truncf %42 : vector<16x32xf32> to vector<16x32xbf16>
    %cst_30 = arith.constant dense<0.000000e+00> : vector<8x32xf32>
    %44 = tpu.matmul %18, %43, %cst_30 {dimension_numbers = #tpu.dot_dimension_numbers<[1], [0], [0], [1], [0, 0, 1, 1], [], []>} : vector<8x16xbf16>, vector<16x32xbf16>, vector<8x32xf32> -> vector<8x32xf32>
    %45 = arith.index_cast %22 : i32 to index
    %c0_31 = arith.constant 0 : index
    %46 = vector.load %arg16[%45, %c0_31] : memref<16x32xf32, #tpu.memory_space<vmem>>, vector<8x32xf32>
    tpu.vector_store %arg16[%45, %c0_31], %44 {strides = array<i32>} : memref<16x32xf32, #tpu.memory_space<vmem>>, vector<8x32xf32>,
    %c1_i32 = arith.constant 1 : i32
    %c8_i32_32 = arith.constant 8 : i32
    %47 = arith.muli %c1_i32, %c8_i32_32 : i32
    %48 = tpu.assume_multiple %47, 8 : i32
    %49 = arith.index_cast %48 : i32 to index
    %c0_33 = arith.constant 0 : index
    %50 = vector.load %arg14[%49, %c0_33] : memref<16x32xbf16, #tpu.memory_space<vmem>>, vector<8x32xbf16>
    %51 = arith.index_cast %48 : i32 to index
    %c0_34 = arith.constant 0 : index
    %52 = vector.load %arg15[%51, %c0_34] : memref<16x32xbf16, #tpu.memory_space<vmem>>, vector<8x32xbf16>
    %53 = tpu.concatenate %50, %52 in 0 : vector<8x32xbf16>, vector<8x32xbf16> -> vector<16x32xbf16>
    %cst_35 = arith.constant dense<0.000000e+00> : vector<16x32xf32>
    %54 = tpu.matmul %17, %53, %cst_35 {dimension_numbers = #tpu.dot_dimension_numbers<[1], [0], [0], [1], [0, 0, 1, 1], [], []>} : vector<16x16xbf16>, vector<16x32xbf16>, vector<16x32xf32> -> vector<16x32xf32>
    %55 = arith.addf %54, %7 : vector<16x32xf32>
    %56 = arith.negf %55 : vector<16x32xf32>
    %57 = math.exp %56 : vector<16x32xf32>
    %cst_36 = arith.constant 1.000000e+00 : f32
    %58 = vector.broadcast %cst_36 : f32 to vector<16x32xf32>
    %59 = arith.addf %58, %57 : vector<16x32xf32>
    %60 = arith.divf %58, %59 : vector<16x32xf32>
    %cst_37 = arith.constant dense<0.000000e+00> : vector<16x32xf32>
    %61 = tpu.matmul %60, %19, %cst_37 {dimension_numbers = #tpu.dot_dimension_numbers<[1], [0], [0], [1], [0, 0, 1, 1], [], []>} : vector<16x32xf32>, vector<32x32xf32>, vector<16x32xf32> -> vector<16x32xf32>
    %62 = vector.broadcast %20 : vector<1x32xf32> to vector<16x32xf32>
    %63 = arith.addf %61, %62 : vector<16x32xf32>
    %64 = arith.negf %63 : vector<16x32xf32>
    %65 = math.exp %64 : vector<16x32xf32>
    %cst_38 = arith.constant 1.000000e+00 : f32
    %66 = vector.broadcast %cst_38 : f32 to vector<16x32xf32>
    %67 = arith.addf %66, %65 : vector<16x32xf32>
    %68 = arith.divf %66, %67 : vector<16x32xf32>
    %69 = arith.truncf %68 : vector<16x32xf32> to vector<16x32xbf16>
    %cst_39 = arith.constant dense<0.000000e+00> : vector<8x32xf32>
    %70 = tpu.matmul %18, %69, %cst_39 {dimension_numbers = #tpu.dot_dimension_numbers<[1], [0], [0], [1], [0, 0, 1, 1], [], []>} : vector<8x16xbf16>, vector<16x32xbf16>, vector<8x32xf32> -> vector<8x32xf32>
    %71 = arith.index_cast %48 : i32 to index
    %c0_40 = arith.constant 0 : index
    %72 = vector.load %arg16[%71, %c0_40] : memref<16x32xf32, #tpu.memory_space<vmem>>, vector<8x32xf32>
    tpu.vector_store %arg16[%71, %c0_40], %70 {strides = array<i32>} : memref<16x32xf32, #tpu.memory_space<vmem>>, vector<8x32xf32>,
    %c2_i32 = arith.constant 2 : i32
    %c0_41 = arith.constant 0 : index
    %c0_42 = arith.constant 0 : index
    %73 = vector.load %arg16[%c0_41, %c0_42] : memref<16x32xf32, #tpu.memory_space<vmem>>, vector<16x32xf32>
    %c0_43 = arith.constant 0 : index
    %c0_44 = arith.constant 0 : index
    %74 = vector.load %arg11[%c0_43, %c0_44] : memref<32x128xf32, #tpu.memory_space<vmem>>, vector<32x128xf32>
    %cst_45 = arith.constant dense<0.000000e+00> : vector<16x128xf32>
    %75 = tpu.matmul %73, %74, %cst_45 {dimension_numbers = #tpu.dot_dimension_numbers<[1], [0], [0], [1], [0, 0, 1, 1], [], []>} : vector<16x32xf32>, vector<32x128xf32>, vector<16x128xf32> -> vector<16x128xf32>
    %c0_46 = arith.constant 0 : index
    %c0_47 = arith.constant 0 : index
    %76 = vector.load %arg12[%c0_46, %c0_47] : memref<1x128xf32, #tpu.memory_space<vmem>>, vector<1x128xf32>
    %77 = vector.broadcast %76 : vector<1x128xf32> to vector<16x128xf32>
    %78 = arith.addf %75, %77 : vector<16x128xf32>
    %79 = arith.negf %78 : vector<16x128xf32>
    %80 = math.exp %79 : vector<16x128xf32>
    %cst_48 = arith.constant 1.000000e+00 : f32
    %81 = vector.broadcast %cst_48 : f32 to vector<16x128xf32>
    %82 = arith.addf %81, %80 : vector<16x128xf32>
    %83 = arith.divf %81, %82 : vector<16x128xf32>
    %c0_49 = arith.constant 0 : index
    %c0_50 = arith.constant 0 : index
    %84 = vector.load %arg13[%c0_49, %c0_50] : memref<16x128xf32, #tpu.memory_space<vmem>>, vector<16x128xf32>
    tpu.vector_store %arg13[%c0_49, %c0_50], %83 {strides = array<i32>} : memref<16x128xf32, #tpu.memory_space<vmem>>, vector<16x128xf32>,
    return
  }
  func.func @transform_0(%arg0: i32) -> (i32, i32) {
    %c0_i32 = arith.constant 0 : i32
    %c0_i32_0 = arith.constant 0 : i32
    return %arg0, %c0_i32 : i32, i32
  }
  func.func @transform_1(%arg0: i32) -> (i32, i32) {
    %c0_i32 = arith.constant 0 : i32
    %c0_i32_0 = arith.constant 0 : i32
    %c0_i32_1 = arith.constant 0 : i32
    return %c0_i32, %c0_i32_0 : i32, i32
  }
  func.func @transform_2(%arg0: i32) -> (i32, i32) {
    %c0_i32 = arith.constant 0 : i32
    %c0_i32_0 = arith.constant 0 : i32
    %c0_i32_1 = arith.constant 0 : i32
    return %c0_i32, %c0_i32_0 : i32, i32
  }
  func.func @transform_3(%arg0: i32) -> (i32, i32) {
    %c0_i32 = arith.constant 0 : i32
    %c0_i32_0 = arith.constant 0 : i32
    %c0_i32_1 = arith.constant 0 : i32
    return %c0_i32, %c0_i32_0 : i32, i32
  }
  func.func @transform_4(%arg0: i32) -> (i32, i32) {
    %c0_i32 = arith.constant 0 : i32
    %c0_i32_0 = arith.constant 0 : i32
    %c0_i32_1 = arith.constant 0 : i32
    return %c0_i32, %c0_i32_0 : i32, i32
  }
  func.func @transform_5(%arg0: i32) -> (i32, i32) {
    %c0_i32 = arith.constant 0 : i32
    %c0_i32_0 = arith.constant 0 : i32
    %c0_i32_1 = arith.constant 0 : i32
    return %c0_i32, %c0_i32_0 : i32, i32
  }
  func.func @transform_6(%arg0: i32) -> (i32, i32) {
    %c0_i32 = arith.constant 0 : i32
    %c0_i32_0 = arith.constant 0 : i32
    %c0_i32_1 = arith.constant 0 : i32
    return %c0_i32, %c0_i32_0 : i32, i32
  }
  func.func @transform_7(%arg0: i32) -> (i32, i32) {
    %c0_i32 = arith.constant 0 : i32
    %c0_i32_0 = arith.constant 0 : i32
    %c0_i32_1 = arith.constant 0 : i32
    return %c0_i32, %c0_i32_0 : i32, i32
  }
  func.func @transform_8(%arg0: i32) -> (i32, i32) {
    %c0_i32 = arith.constant 0 : i32
    %c0_i32_0 = arith.constant 0 : i32
    %c0_i32_1 = arith.constant 0 : i32
    return %c0_i32, %c0_i32_0 : i32, i32
  }
  func.func @transform_9(%arg0: i32) -> (i32, i32) {
    %c0_i32 = arith.constant 0 : i32
    %c0_i32_0 = arith.constant 0 : i32
    %c0_i32_1 = arith.constant 0 : i32
    return %c0_i32, %c0_i32_0 : i32, i32
  }
  func.func @transform_10(%arg0: i32) -> (i32, i32) {
    %c0_i32 = arith.constant 0 : i32
    %c0_i32_0 = arith.constant 0 : i32
    %c0_i32_1 = arith.constant 0 : i32
    return %c0_i32, %c0_i32_0 : i32, i32
  }
  func.func @transform_11(%arg0: i32) -> (i32, i32) {
    %c0_i32 = arith.constant 0 : i32
    %c0_i32_0 = arith.constant 0 : i32
    %c0_i32_1 = arith.constant 0 : i32
    return %c0_i32, %c0_i32_0 : i32, i32
  }
  func.func @transform_12(%arg0: i32) -> (i32, i32) {
    %c0_i32 = arith.constant 0 : i32
    %c0_i32_0 = arith.constant 0 : i32
    return %arg0, %c0_i32 : i32, i32
  }
}

</mosaic_0001>

<llo_original>
// kernel: tpu_custom_call.1
$region0: #{tpu_custom_call.1}
  #allocation0 [shape = 'u32[]', space=smem, size = 0x4, offset = 0x4, fixed_abs, tag = 'smem constant byte address 0x4 - core index']
  #allocation1 [shape = 'u32[72,128]{1,0:T(1,128)}', space=vmem, size = 0x9000, scoped, tag = 'internal scratch']
  #allocation2 [shape = 'bf16[16,32]{1,0:T(8,128)(2,1)}', space=vmem, size = 0x1000, scoped, tag = 'scratch operand']
  #allocation3 [shape = 'bf16[16,32]{1,0:T(8,128)(2,1)}', space=vmem, size = 0x1000, scoped, tag = 'scratch operand']
  #allocation4 [shape = 'f32[16,32]{1,0:T(8,128)}', space=vmem, size = 0x2000, scoped, tag = 'scratch operand']
  %s0 = inlined_call_operand.vmem [shape: f32[16,4], index: 0, kind: input, shape index: {}]
  %s1 = inlined_call_operand.hbm [shape: bf16[16,16], index: 1, kind: input, shape index: {}]
  %s2 = inlined_call_operand.vmem [shape: bf16[8,16], index: 2, kind: input, shape index: {}]
  %s3 = inlined_call_operand.vmem [shape: f32[16,1], index: 3, kind: input, shape index: {}]
  %s4 = inlined_call_operand.hbm [shape: f32[4,32], index: 4, kind: input, shape index: {}]
  %s5 = inlined_call_operand.vmem [shape: f32[4,32], index: 5, kind: input, shape index: {}]
  %s6 = inlined_call_operand.vmem [shape: f32[1,32], index: 6, kind: input, shape index: {}]
  %s7 = inlined_call_operand.vmem [shape: f32[1,32], index: 7, kind: input, shape index: {}]
  %s8 = inlined_call_operand.vmem [shape: f32[32,32], index: 8, kind: input, shape index: {}]
  %s9 = inlined_call_operand.vmem [shape: f32[1,32], index: 9, kind: input, shape index: {}]
  %s10 = inlined_call_operand.hbm [shape: f32[32,128], index: 10, kind: input, shape index: {}]
  %s11 = inlined_call_operand.vmem [shape: f32[1,128], index: 11, kind: input, shape index: {}]
  %s12 = inlined_call_operand.hbm [shape: f32[16,128], index: 12, kind: output, shape index: {}]
  %s13 = sld [smem:[#allocation0]]
  $region70: #{tpu_custom_call.1} parent=0
    _
  %s15 = ssub.s32 1, %s13
  %s16 = scalar_select 0, %s15, %s13
  $region1: #{tpu_custom_call.1} parent=0
    #allocation5 [shape = 'u8[4096]{0}', space=vmem, size = 0x1000, scoped, tag = 'input window, operand 1, single buffered']
    #allocation6 [shape = 's32[1]{0}', space=sflag, size = 0x4, scoped, tag = 'scoped memory for tpu_custom_call.1']
    #allocation7 [shape = 's32[1]{0}', space=sflag, size = 0x4, scoped, tag = 'scoped memory for tpu_custom_call.1']
    #allocation8 [shape = 'u8[2048]{0}', space=vmem, size = 0x800, scoped, tag = 'input window, operand 4, single buffered']
    #allocation9 [shape = 's32[1]{0}', space=sflag, size = 0x4, scoped, tag = 'scoped memory for tpu_custom_call.1']
    #allocation10 [shape = 'u8[16384]{0}', space=vmem, size = 0x4000, scoped, tag = 'input window, operand 10, single buffered']
    #allocation11 [shape = 'u8[8192]{0}', space=vmem, size = 0x2000, scoped, tag = 'output window, operand 0, single buffered']
    %17 = vsyncpa [#allocation6], 0
    %18 = vsyncpa [#allocation9], 0
    %19 = vsyncpa [#allocation7], 0
    // Predicated region
    $region2: #{tpu_custom_call.1} parent=1 // pred_check
      _
    $region3: #{tpu_custom_call.1} parent=1 // pred_check_branch
      %21 = sbr.rel (0) target = $region5
    $region4: #{tpu_custom_call.1} parent=1 // pred_region
      _
    $region5: #{tpu_custom_call.1} parent=1 // pred_fallthru
      _
    // Predicated region
    $region6: #{tpu_custom_call.1} parent=1 // pred_check
      _
    $region7: #{tpu_custom_call.1} parent=1 // pred_check_branch
      %23 = sbr.rel (0) target = $region9
    $region8: #{tpu_custom_call.1} parent=1 // pred_region
      %25 = vsyncadd [#allocation6], 0
      %s26 = sshll.u32 %s1, 4
      %s27 = int_to_ptr.hbm [resolvable:$true] %s26
      %s28 = sshll.u32 [#allocation5], 4
      %s29 = int_to_ptr.vmem [resolvable:$true] %s28
      %34 = dma.hbm_to_vmem [thread:$0]  %s27, 128, %s29, [#allocation6], 64, 64, 4
    $region9: #{tpu_custom_call.1} parent=1 // pred_fallthru
      _
    // Predicated region
    $region10: #{tpu_custom_call.1} parent=1 // pred_check
      _
    $region11: #{tpu_custom_call.1} parent=1 // pred_check_branch
      %36 = sbr.rel (0) target = $region13
    $region12: #{tpu_custom_call.1} parent=1 // pred_region
      _
    $region13: #{tpu_custom_call.1} parent=1 // pred_fallthru
      _
    // Predicated region
    $region14: #{tpu_custom_call.1} parent=1 // pred_check
      _
    $region15: #{tpu_custom_call.1} parent=1 // pred_check_branch
      %38 = sbr.rel (0) target = $region17
    $region16: #{tpu_custom_call.1} parent=1 // pred_region
      _
    $region17: #{tpu_custom_call.1} parent=1 // pred_fallthru
      _
    // Predicated region
    $region18: #{tpu_custom_call.1} parent=1 // pred_check
      _
    $region19: #{tpu_custom_call.1} parent=1 // pred_check_branch
      %40 = sbr.rel (0) target = $region21
    $region20: #{tpu_custom_call.1} parent=1 // pred_region
      %42 = vsyncadd [#allocation9], 0
      %s44 = sshll.u32 %s4, 4
      %s45 = int_to_ptr.hbm [resolvable:$true] %s44
      %s46 = sshll.u32 [#allocation8], 4
      %s47 = int_to_ptr.vmem [resolvable:$true] %s46
      %49 = dma.hbm_to_vmem [thread:$0]  %s45, 64, %s47, [#allocation9]
    $region21: #{tpu_custom_call.1} parent=1 // pred_fallthru
      _
    // Predicated region
    $region22: #{tpu_custom_call.1} parent=1 // pred_check
      _
    $region23: #{tpu_custom_call.1} parent=1 // pred_check_branch
      %51 = sbr.rel (0) target = $region25
    $region24: #{tpu_custom_call.1} parent=1 // pred_region
      _
    $region25: #{tpu_custom_call.1} parent=1 // pred_fallthru
      _
    // Predicated region
    $region26: #{tpu_custom_call.1} parent=1 // pred_check
      _
    $region27: #{tpu_custom_call.1} parent=1 // pred_check_branch
      %53 = sbr.rel (0) target = $region29
    $region28: #{tpu_custom_call.1} parent=1 // pred_region
      _
    $region29: #{tpu_custom_call.1} parent=1 // pred_fallthru
      _
    // Predicated region
    $region30: #{tpu_custom_call.1} parent=1 // pred_check
      _
    $region31: #{tpu_custom_call.1} parent=1 // pred_check_branch
      %55 = sbr.rel (0) target = $region33
    $region32: #{tpu_custom_call.1} parent=1 // pred_region
      _
    $region33: #{tpu_custom_call.1} parent=1 // pred_fallthru
      _
    // Predicated region
    $region34: #{tpu_custom_call.1} parent=1 // pred_check
      _
    $region35: #{tpu_custom_call.1} parent=1 // pred_check_branch
      %57 = sbr.rel (0) target = $region37
    $region36: #{tpu_custom_call.1} parent=1 // pred_region
      _
    $region37: #{tpu_custom_call.1} parent=1 // pred_fallthru
      _
    // Predicated region
    $region38: #{tpu_custom_call.1} parent=1 // pred_check
      _
    $region39: #{tpu_custom_call.1} parent=1 // pred_check_branch
      %59 = sbr.rel (0) target = $region41
    $region40: #{tpu_custom_call.1} parent=1 // pred_region
      _
    $region41: #{tpu_custom_call.1} parent=1 // pred_fallthru
      _
    // Predicated region
    $region42: #{tpu_custom_call.1} parent=1 // pred_check
      _
    $region43: #{tpu_custom_call.1} parent=1 // pred_check_branch
      %61 = sbr.rel (0) target = $region45
    $region44: #{tpu_custom_call.1} parent=1 // pred_region
      %63 = vsyncadd [#allocation9], 0
      %s64 = sshll.u32 %s10, 4
      %s65 = int_to_ptr.hbm [resolvable:$true] %s64
      %s66 = sshll.u32 [#allocation10], 4
      %s67 = int_to_ptr.vmem [resolvable:$true] %s66
      %72 = dma.hbm_to_vmem [thread:$0]  %s65, 512, %s67, [#allocation9], 128, 128, 8
    $region45: #{tpu_custom_call.1} parent=1 // pred_fallthru
      _
    // Predicated region
    $region46: #{tpu_custom_call.1} parent=1 // pred_check
      _
    $region47: #{tpu_custom_call.1} parent=1 // pred_check_branch
      %74 = sbr.rel (0) target = $region49
    $region48: #{tpu_custom_call.1} parent=1 // pred_region
      _
    $region49: #{tpu_custom_call.1} parent=1 // pred_fallthru
      _
    // Predicated region
    $region50: #{tpu_custom_call.1} parent=1 // pred_check
      _
    $region51: #{tpu_custom_call.1} parent=1 // pred_check_branch
      %76 = sbr.rel (0) target = $region53
    $region52: #{tpu_custom_call.1} parent=1 // pred_region
      %78 = dma.done [#allocation6], 128
    $region53: #{tpu_custom_call.1} parent=1 // pred_fallthru
      _
    // Predicated region
    $region54: #{tpu_custom_call.1} parent=1 // pred_check
      _
    $region55: #{tpu_custom_call.1} parent=1 // pred_check_branch
      %80 = sbr.rel (0) target = $region57
    $region56: #{tpu_custom_call.1} parent=1 // pred_region
      %82 = dma.done [#allocation9], 64
    $region57: #{tpu_custom_call.1} parent=1 // pred_fallthru
      _
    // Predicated region
    $region58: #{tpu_custom_call.1} parent=1 // pred_check
      _
    $region59: #{tpu_custom_call.1} parent=1 // pred_check_branch
      %84 = sbr.rel (0) target = $region61
    $region60: #{tpu_custom_call.1} parent=1 // pred_region
      %86 = dma.done [#allocation9], 512
    $region61: #{tpu_custom_call.1} parent=1 // pred_fallthru
      _
    %v88 = vld [vmem:[%s3] sm:$0xff]
    %v89 = vld [vmem:[%s3 + $0x8] sm:$0xff]
    %v90 = vld [vmem:[%s6] sm:$0x1]
    %92 = vset.pattern.permute.xlu0 0
    %93 = vperm.xlu0 %92, %v88
    %v94 = vpop.permute.xlu0 %93
    %97 = vset.pattern.permute.xlu0 0
    %98 = vperm.xlu0 %97, %v89
    %v99 = vpop.permute.xlu0 %98
    %v102 = vperm.slane %v90, 0
    %v104 = vmul.f32 %v94, %v102
    %v105 = vmul.f32 %v99, %v102
    %v106 = vld [vmem:[%s7] sm:$0x1]
    %v108 = vperm.slane %v106, 0
    %v110 = vadd.f32 %v104, %v108
    %v111 = vadd.f32 %v105, %v108
    %v112 = vld [vmem:[%s0] sm:$0xff]
    %v113 = vld [vmem:[%s0 + $0x8] sm:$0xff]
    %v114 = vld [vmem:[#allocation8] sm:$0xf]
    %vm115 = vcmask 31744
    %v117 = vsel %vm115, %v112, 0
    %v120 = vsel %vm115, %v113, 0
    %vm122 = vcmask 1043456
    %v124 = vsel %vm122, %v114, 0
    %126 = vmatpush.msra.mxu0 0.0
    %127 = vmatpush.msra.mxu0 0.0
    %128 = vmatpush.msra.mxu0 0.0
    %129 = vmatpush.msra.mxu0 0.0
    %130 = vmatpush.msra.mxu0 0.0
    %131 = vmatpush.msra.mxu0 0.0
    %132 = vmatpush.msra.mxu0 0.0
    %133 = vmatpush.msra.mxu0 0.0
    %134 = vmatpush.msra.mxu0 0.0
    %135 = vmatpush.msra.mxu0 0.0
    %136 = vmatpush.msra.mxu0 0.0
    %137 = vmatpush.msra.mxu0 0.0
    %138 = vmatpush.msra.mxu0 0.0
    %139 = vmatpush.msra.mxu0 0.0
    %140 = vmatpush.msra.mxu0 0.0
    %141 = vmatpush.msra.mxu0 %v124
    %142 = vmatmul.f32.gmra.mxu0 %v117
    %v143 = vpop.f32.mrf.mxu0
    %v144 = vadd.f32 0.0, %v143
    %145 = vmatmul.f32.gmra.mxu0 %v120
    %v146 = vpop.f32.mrf.mxu0
    %v147 = vadd.f32 0.0, %v146
    %148 = vdwg.mxu0
    %v149 = vpack.c.bf16 %v144, %v144
    %v150 = vpack.c.bf16 %v147, %v147
    %vm151 = vcmask 257024
    %152 = vst.msk [vmem:[#allocation2] sm:$0xf] %vm151, %v149
    %153 = vst.msk [vmem:[#allocation2 + $0x4] sm:$0xf] %vm151, %v150
    %v154 = vld [vmem:[%s5] sm:$0xf]
    %v156 = vsel %vm122, %v154, 0
    %158 = vmatpush.msra.mxu0 0.0
    %159 = vmatpush.msra.mxu0 0.0
    %160 = vmatpush.msra.mxu0 0.0
    %161 = vmatpush.msra.mxu0 0.0
    %162 = vmatpush.msra.mxu0 0.0
    %163 = vmatpush.msra.mxu0 0.0
    %164 = vmatpush.msra.mxu0 0.0
    %165 = vmatpush.msra.mxu0 0.0
    %166 = vmatpush.msra.mxu0 0.0
    %167 = vmatpush.msra.mxu0 0.0
    %168 = vmatpush.msra.mxu0 0.0
    %169 = vmatpush.msra.mxu0 0.0
    %170 = vmatpush.msra.mxu0 0.0
    %171 = vmatpush.msra.mxu0 0.0
    %172 = vmatpush.msra.mxu0 0.0
    %173 = vmatpush.msra.mxu0 %v156
    %174 = vmatmul.f32.gmra.mxu0 %v117
    %v175 = vpop.f32.mrf.mxu0
    %v176 = vadd.f32 0.0, %v175
    %177 = vmatmul.f32.gmra.mxu0 %v120
    %v178 = vpop.f32.mrf.mxu0
    %v179 = vadd.f32 0.0, %v178
    %180 = vdwg.mxu0
    %v181 = vpack.c.bf16 %v176, %v176
    %v182 = vpack.c.bf16 %v179, %v179
    %183 = vst.msk [vmem:[#allocation3] sm:$0xf] %vm151, %v181
    %184 = vst.msk [vmem:[#allocation3 + $0x4] sm:$0xf] %vm151, %v182
    %v185 = vld [vmem:[#allocation5] sm:$0xf]
    %v186 = vld [vmem:[#allocation5 + $0x4] sm:$0xf]
    %v187 = vld [vmem:[%s2] sm:$0xf]
    %v188 = vld [vmem:[%s8] sm:$0xff]
    %v189 = vld [vmem:[%s8 + $0x8] sm:$0xff]
    %v190 = vld [vmem:[%s8 + $0x10] sm:$0xff]
    %v191 = vld [vmem:[%s8 + $0x18] sm:$0xff]
    %v192 = vld [vmem:[%s9] sm:$0x1]
    %v193 = vld [vmem:[#allocation2] sm:$0xf]
    %v194 = vld [vmem:[#allocation3] sm:$0xf]
    %v196 = vunpack.c.l.b16 %v194
    %v197 = vpack.c.b16 %v196, %v196
    %v200 = vsel %vm122, %v193, %v197
    %v204 = vunpack.c.l.b16 %v185
    %v205 = vunpack.c.l.b16 %v186
    %v206 = vpack.c.b16 %v205, %v204
    %vm207 = vcmask 130048
    %v209 = vsel %vm207, %v206, 0
    %211 = vmatpush.bf16.msra.mxu0 0
    %212 = vmatpush.bf16.msra.mxu0 0
    %213 = vmatpush.bf16.msra.mxu0 0
    %214 = vmatpush.bf16.msra.mxu0 0
    %215 = vmatpush.bf16.msra.mxu0 0
    %216 = vmatpush.bf16.msra.mxu0 0
    %217 = vmatpush.bf16.msra.mxu0 0
    %218 = vmatpush.bf16.msra.mxu0 %v200
    %219 = vmatmul.bf16.gmra.mxu0 %v209
    %v220 = vpop.f32.mrf.mxu0
    %v221 = vadd.f32 %v110, %v220
    %v222 = vpop.f32.mrf.mxu0
    %v223 = vadd.f32 %v111, %v222
    %224 = vdwg.mxu0
    %v225 = vxor.u32 %v221, 2147483648
    %v226 = vxor.u32 %v223, 2147483648
    %v227 = vmul.f32 %v225, 1.442695
    %v228 = vpow.pop %v227
    %v229 = vmul.f32 %v226, 1.442695
    %v230 = vpow.pop %v229
    %v231 = vadd.f32 %v228, 1.0
    %v232 = vadd.f32 %v230, 1.0
    %v233 = vrcp.pop %v231
    %v234 = vmul.f32 %v231, %v233
    %v235 = vsub.f32 1.0, %v234
    %v236 = vmul.f32 %v233, %v235
    %v237 = vadd.f32 %v233, %v236
    %vm238 = vweird.f32 %v231
    %vm239 = vweird.f32 %v233
    %vm240 = vmor %vm238, %vm239
    %v241 = vsel %vm240, %v233, %v237
    %v242 = vand.u32 2147483647, %v231
    %vm243 = vcmp.eq.f32.partialorder %v242, 8.507059e+37
    %v244 = vand.u32 %v231, 2147483648
    %v245 = vor.u32 1.1754944e-38, %v244
    %v246 = vsel %vm243, %v245, %v241
    %v247 = vmul.f32 1.0, %v246
    %v248 = vrcp.pop %v232
    %v249 = vmul.f32 %v232, %v248
    %v250 = vsub.f32 1.0, %v249
    %v251 = vmul.f32 %v248, %v250
    %v252 = vadd.f32 %v248, %v251
    %vm253 = vweird.f32 %v232
    %vm254 = vweird.f32 %v248
    %vm255 = vmor %vm253, %vm254
    %v256 = vsel %vm255, %v248, %v252
    %v257 = vand.u32 2147483647, %v232
    %vm258 = vcmp.eq.f32.partialorder %v257, 8.507059e+37
    %v259 = vand.u32 %v232, 2147483648
    %v260 = vor.u32 1.1754944e-38, %v259
    %v261 = vsel %vm258, %v260, %v256
    %v262 = vmul.f32 1.0, %v261
    %v264 = vperm.slane %v192, 0
    %vm266 = vcmask 261120
    %v268 = vsel %vm266, %v247, 0
    %v271 = vsel %vm266, %v262, 0
    %273 = vmatpush.msra.mxu0 0.0
    %274 = vmatpush.msra.mxu0 0.0
    %275 = vmatpush.msra.mxu0 0.0
    %276 = vmatpush.msra.mxu0 0.0
    %277 = vmatpush.msra.mxu0 0.0
    %278 = vmatpush.msra.mxu0 0.0
    %279 = vmatpush.msra.mxu0 0.0
    %280 = vmatpush.msra.mxu0 0.0
    %281 = vmatpush.msra.mxu0 0.0
    %282 = vmatpush.msra.mxu0 0.0
    %283 = vmatpush.msra.mxu0 0.0
    %284 = vmatpush.msra.mxu0 0.0
    %285 = vmatpush.msra.mxu0 %v191
    %286 = vmatpush.msra.mxu0 %v190
    %287 = vmatpush.msra.mxu0 %v189
    %288 = vmatpush.msra.mxu0 %v188
    %289 = vmatmul.f32.gmra.mxu0 %v268
    %v290 = vpop.f32.mrf.mxu0
    %v291 = vadd.f32 %v264, %v290
    %292 = vmatmul.f32.gmra.mxu0 %v271
    %v293 = vpop.f32.mrf.mxu0
    %v294 = vadd.f32 %v264, %v293
    %295 = vdwg.mxu0
    %v296 = vxor.u32 %v291, 2147483648
    %v297 = vxor.u32 %v294, 2147483648
    %v298 = vmul.f32 %v296, 1.442695
    %v299 = vpow.pop %v298
    %v300 = vmul.f32 %v297, 1.442695
    %v301 = vpow.pop %v300
    %v302 = vadd.f32 %v299, 1.0
    %v303 = vadd.f32 %v301, 1.0
    %v304 = vrcp.pop %v302
    %v305 = vmul.f32 %v302, %v304
    %v306 = vsub.f32 1.0, %v305
    %v307 = vmul.f32 %v304, %v306
    %v308 = vadd.f32 %v304, %v307
    %vm309 = vweird.f32 %v302
    %vm310 = vweird.f32 %v304
    %vm311 = vmor %vm309, %vm310
    %v312 = vsel %vm311, %v304, %v308
    %v313 = vand.u32 2147483647, %v302
    %vm314 = vcmp.eq.f32.partialorder %v313, 8.507059e+37
    %v315 = vand.u32 %v302, 2147483648
    %v316 = vor.u32 1.1754944e-38, %v315
    %v317 = vsel %vm314, %v316, %v312
    %v318 = vmul.f32 1.0, %v317
    %v319 = vrcp.pop %v303
    %v320 = vmul.f32 %v303, %v319
    %v321 = vsub.f32 1.0, %v320
    %v322 = vmul.f32 %v319, %v321
    %v323 = vadd.f32 %v319, %v322
    %vm324 = vweird.f32 %v303
    %vm325 = vweird.f32 %v319
    %vm326 = vmor %vm324, %vm325
    %v327 = vsel %vm326, %v319, %v323
    %v328 = vand.u32 2147483647, %v303
    %vm329 = vcmp.eq.f32.partialorder %v328, 8.507059e+37
    %v330 = vand.u32 %v303, 2147483648
    %v331 = vor.u32 1.1754944e-38, %v330
    %v332 = vsel %vm329, %v331, %v327
    %v333 = vmul.f32 1.0, %v332
    %v334 = vpack.c.bf16 %v333, %v318
    %v336 = vsel %vm207, %v187, 0
    %338 = vmatpush.bf16.msra.mxu0 0
    %339 = vmatpush.bf16.msra.mxu0 0
    %340 = vmatpush.bf16.msra.mxu0 0
    %341 = vmatpush.bf16.msra.mxu0 0
    %342 = vmatpush.bf16.msra.mxu0 0
    %343 = vmatpush.bf16.msra.mxu0 0
    %344 = vmatpush.bf16.msra.mxu0 0
    %345 = vmatpush.bf16.msra.mxu0 %v334
    %346 = vmatmul.bf16.gmra.mxu0 %v336
    %v347 = vpop.f32.mrf.mxu0
    %v348 = vadd.f32 0.0, %v347
    %v349 = vpop.f32.mrf.mxu0
    %350 = vdwg.mxu0
    %351 = vst.msk [vmem:[#allocation4] sm:$0xff] %vm266, %v348
    %s352 = scalar_lea.vmem [#allocation2], 4
    %v353 = vld [vmem:[%s352] sm:$0xf]
    %s354 = scalar_lea.vmem [#allocation3], 4
    %v355 = vld [vmem:[%s354] sm:$0xf]
    %v357 = vunpack.c.l.b16 %v355
    %v358 = vpack.c.b16 %v357, %v357
    %v361 = vsel %vm122, %v353, %v358
    %363 = vmatpush.bf16.msra.mxu0 0
    %364 = vmatpush.bf16.msra.mxu0 0
    %365 = vmatpush.bf16.msra.mxu0 0
    %366 = vmatpush.bf16.msra.mxu0 0
    %367 = vmatpush.bf16.msra.mxu0 0
    %368 = vmatpush.bf16.msra.mxu0 0
    %369 = vmatpush.bf16.msra.mxu0 0
    %370 = vmatpush.bf16.msra.mxu0 %v361
    %371 = vmatmul.bf16.gmra.mxu0 %v209
    %v372 = vpop.f32.mrf.mxu0
    %v373 = vadd.f32 %v110, %v372
    %v374 = vpop.f32.mrf.mxu0
    %v375 = vadd.f32 %v111, %v374
    %376 = vdwg.mxu0
    %v377 = vxor.u32 %v373, 2147483648
    %v378 = vxor.u32 %v375, 2147483648
    %v379 = vmul.f32 %v377, 1.442695
    %v380 = vpow.pop %v379
    %v381 = vmul.f32 %v378, 1.442695
    %v382 = vpow.pop %v381
    %v383 = vadd.f32 %v380, 1.0
    %v384 = vadd.f32 %v382, 1.0
    %v385 = vrcp.pop %v383
    %v386 = vmul.f32 %v383, %v385
    %v387 = vsub.f32 1.0, %v386
    %v388 = vmul.f32 %v385, %v387
    %v389 = vadd.f32 %v385, %v388
    %vm390 = vweird.f32 %v383
    %vm391 = vweird.f32 %v385
    %vm392 = vmor %vm390, %vm391
    %v393 = vsel %vm392, %v385, %v389
    %v394 = vand.u32 2147483647, %v383
    %vm395 = vcmp.eq.f32.partialorder %v394, 8.507059e+37
    %v396 = vand.u32 %v383, 2147483648
    %v397 = vor.u32 1.1754944e-38, %v396
    %v398 = vsel %vm395, %v397, %v393
    %v399 = vmul.f32 1.0, %v398
    %v400 = vrcp.pop %v384
    %v401 = vmul.f32 %v384, %v400
    %v402 = vsub.f32 1.0, %v401
    %v403 = vmul.f32 %v400, %v402
    %v404 = vadd.f32 %v400, %v403
    %vm405 = vweird.f32 %v384
    %vm406 = vweird.f32 %v400
    %vm407 = vmor %vm405, %vm406
    %v408 = vsel %vm407, %v400, %v404
    %v409 = vand.u32 2147483647, %v384
    %vm410 = vcmp.eq.f32.partialorder %v409, 8.507059e+37
    %v411 = vand.u32 %v384, 2147483648
    %v412 = vor.u32 1.1754944e-38, %v411
    %v413 = vsel %vm410, %v412, %v408
    %v414 = vmul.f32 1.0, %v413
    %v416 = vsel %vm266, %v399, 0
    %v419 = vsel %vm266, %v414, 0
    %421 = vmatpush.msra.mxu0 0.0
    %422 = vmatpush.msra.mxu0 0.0
    %423 = vmatpush.msra.mxu0 0.0
    %424 = vmatpush.msra.mxu0 0.0
    %425 = vmatpush.msra.mxu0 0.0
    %426 = vmatpush.msra.mxu0 0.0
    %427 = vmatpush.msra.mxu0 0.0
    %428 = vmatpush.msra.mxu0 0.0
    %429 = vmatpush.msra.mxu0 0.0
    %430 = vmatpush.msra.mxu0 0.0
    %431 = vmatpush.msra.mxu0 0.0
    %432 = vmatpush.msra.mxu0 0.0
    %433 = vmatpush.msra.mxu0 %v191
    %434 = vmatpush.msra.mxu0 %v190
    %435 = vmatpush.msra.mxu0 %v189
    %436 = vmatpush.msra.mxu0 %v188
    %437 = vmatmul.f32.gmra.mxu0 %v416
    %v438 = vpop.f32.mrf.mxu0
    %v439 = vadd.f32 %v264, %v438
    %440 = vmatmul.f32.gmra.mxu0 %v419
    %v441 = vpop.f32.mrf.mxu0
    %v442 = vadd.f32 %v264, %v441
    %443 = vdwg.mxu0
    %v444 = vxor.u32 %v439, 2147483648
    %v445 = vxor.u32 %v442, 2147483648
    %v446 = vmul.f32 %v444, 1.442695
    %v447 = vpow.pop %v446
    %v448 = vmul.f32 %v445, 1.442695
    %v449 = vpow.pop %v448
    %v450 = vadd.f32 %v447, 1.0
    %v451 = vadd.f32 %v449, 1.0
    %v452 = vrcp.pop %v450
    %v453 = vmul.f32 %v450, %v452
    %v454 = vsub.f32 1.0, %v453
    %v455 = vmul.f32 %v452, %v454
    %v456 = vadd.f32 %v452, %v455
    %vm457 = vweird.f32 %v450
    %vm458 = vweird.f32 %v452
    %vm459 = vmor %vm457, %vm458
    %v460 = vsel %vm459, %v452, %v456
    %v461 = vand.u32 2147483647, %v450
    %vm462 = vcmp.eq.f32.partialorder %v461, 8.507059e+37
    %v463 = vand.u32 %v450, 2147483648
    %v464 = vor.u32 1.1754944e-38, %v463
    %v465 = vsel %vm462, %v464, %v460
    %v466 = vmul.f32 1.0, %v465
    %v467 = vrcp.pop %v451
    %v468 = vmul.f32 %v451, %v467
    %v469 = vsub.f32 1.0, %v468
    %v470 = vmul.f32 %v467, %v469
    %v471 = vadd.f32 %v467, %v470
    %vm472 = vweird.f32 %v451
    %vm473 = vweird.f32 %v467
    %vm474 = vmor %vm472, %vm473
    %v475 = vsel %vm474, %v467, %v471
    %v476 = vand.u32 2147483647, %v451
    %vm477 = vcmp.eq.f32.partialorder %v476, 8.507059e+37
    %v478 = vand.u32 %v451, 2147483648
    %v479 = vor.u32 1.1754944e-38, %v478
    %v480 = vsel %vm477, %v479, %v475
    %v481 = vmul.f32 1.0, %v480
    %v482 = vpack.c.bf16 %v481, %v466
    %483 = vmatpush.bf16.msra.mxu0 0
    %484 = vmatpush.bf16.msra.mxu0 0
    %485 = vmatpush.bf16.msra.mxu0 0
    %486 = vmatpush.bf16.msra.mxu0 0
    %487 = vmatpush.bf16.msra.mxu0 0
    %488 = vmatpush.bf16.msra.mxu0 0
    %489 = vmatpush.bf16.msra.mxu0 0
    %490 = vmatpush.bf16.msra.mxu0 %v482
    %491 = vmatmul.bf16.gmra.mxu0 %v336
    %v492 = vpop.f32.mrf.mxu0
    %v493 = vadd.f32 0.0, %v492
    %v494 = vpop.f32.mrf.mxu0
    %495 = vdwg.mxu0
    %s496 = scalar_lea.vmem [#allocation4], 8
    %497 = vst.msk [vmem:[%s496] sm:$0xff] %vm266, %v493
    %v498 = vld [vmem:[#allocation4] sm:$0xff]
    %v499 = vld [vmem:[#allocation4 + $0x8] sm:$0xff]
    %v500 = vld [vmem:[#allocation10] sm:$0xff]
    %v501 = vld [vmem:[#allocation10 + $0x8] sm:$0xff]
    %v502 = vld [vmem:[#allocation10 + $0x10] sm:$0xff]
    %v503 = vld [vmem:[#allocation10 + $0x18] sm:$0xff]
    %v504 = vld [vmem:[%s11] sm:$0x1]
    %v506 = vperm.slane %v504, 0
    %v509 = vsel %vm266, %v498, 0
    %v512 = vsel %vm266, %v499, 0
    %514 = vmatpush.msra.mxu0 0.0
    %515 = vmatpush.msra.mxu0 0.0
    %516 = vmatpush.msra.mxu0 0.0
    %517 = vmatpush.msra.mxu0 0.0
    %518 = vmatpush.msra.mxu0 0.0
    %519 = vmatpush.msra.mxu0 0.0
    %520 = vmatpush.msra.mxu0 0.0
    %521 = vmatpush.msra.mxu0 0.0
    %522 = vmatpush.msra.mxu0 0.0
    %523 = vmatpush.msra.mxu0 0.0
    %524 = vmatpush.msra.mxu0 0.0
    %525 = vmatpush.msra.mxu0 0.0
    %526 = vmatpush.msra.mxu0 %v503
    %527 = vmatpush.msra.mxu0 %v502
    %528 = vmatpush.msra.mxu0 %v501
    %529 = vmatpush.msra.mxu0 %v500
    %530 = vmatmul.f32.gmra.mxu0 %v509
    %v531 = vpop.f32.mrf.mxu0
    %v532 = vadd.f32 %v506, %v531
    %533 = vmatmul.f32.gmra.mxu0 %v512
    %v534 = vpop.f32.mrf.mxu0
    %v535 = vadd.f32 %v506, %v534
    %536 = vdwg.mxu0
    %v537 = vxor.u32 %v532, 2147483648
    %v538 = vxor.u32 %v535, 2147483648
    %v539 = vmul.f32 %v537, 1.442695
    %v540 = vpow.pop %v539
    %v541 = vmul.f32 %v538, 1.442695
    %v542 = vpow.pop %v541
    %v543 = vadd.f32 %v540, 1.0
    %v544 = vadd.f32 %v542, 1.0
    %v545 = vrcp.pop %v543
    %v546 = vmul.f32 %v543, %v545
    %v547 = vsub.f32 1.0, %v546
    %v548 = vmul.f32 %v545, %v547
    %v549 = vadd.f32 %v545, %v548
    %vm550 = vweird.f32 %v543
    %vm551 = vweird.f32 %v545
    %vm552 = vmor %vm550, %vm551
    %v553 = vsel %vm552, %v545, %v549
    %v554 = vand.u32 2147483647, %v543
    %vm555 = vcmp.eq.f32.partialorder %v554, 8.507059e+37
    %v556 = vand.u32 %v543, 2147483648
    %v557 = vor.u32 1.1754944e-38, %v556
    %v558 = vsel %vm555, %v557, %v553
    %v559 = vmul.f32 1.0, %v558
    %v560 = vrcp.pop %v544
    %v561 = vmul.f32 %v544, %v560
    %v562 = vsub.f32 1.0, %v561
    %v563 = vmul.f32 %v560, %v562
    %v564 = vadd.f32 %v560, %v563
    %vm565 = vweird.f32 %v544
    %vm566 = vweird.f32 %v560
    %vm567 = vmor %vm565, %vm566
    %v568 = vsel %vm567, %v560, %v564
    %v569 = vand.u32 2147483647, %v544
    %vm570 = vcmp.eq.f32.partialorder %v569, 8.507059e+37
    %v571 = vand.u32 %v544, 2147483648
    %v572 = vor.u32 1.1754944e-38, %v571
    %v573 = vsel %vm570, %v572, %v568
    %v574 = vmul.f32 1.0, %v573
    %575 = vst [vmem:[#allocation11] sm:$0xff] %v559
    %576 = vst [vmem:[#allocation11 + $0x8] sm:$0xff] %v574
    // Predicated region
    $region62: #{tpu_custom_call.1} parent=1 // pred_check
      _
    $region63: #{tpu_custom_call.1} parent=1 // pred_check_branch
      %578 = sbr.rel (0) target = $region65
    $region64: #{tpu_custom_call.1} parent=1 // pred_region
      %580 = vsyncadd [#allocation7], 0
      %s581 = sshll.u32 [#allocation11], 4
      %s582 = int_to_ptr.vmem [resolvable:$true] %s581
      %s583 = sshll.u32 %s12, 4
      %s584 = int_to_ptr.hbm [resolvable:$true] %s583
      %589 = dma.vmem_to_hbm [thread:$0]  %s582, 256, %s584, [#allocation7], 128, 128, 8
    $region65: #{tpu_custom_call.1} parent=1 // pred_fallthru
      _
    // Predicated region
    $region66: #{tpu_custom_call.1} parent=1 // pred_check
      _
    $region67: #{tpu_custom_call.1} parent=1 // pred_check_branch
      %591 = sbr.rel (0) target = $region69
    $region68: #{tpu_custom_call.1} parent=1 // pred_region
      %593 = dma.done [#allocation7], 256
    $region69: #{tpu_custom_call.1} parent=1 // pred_fallthru
      _
    %594 = vsyncpa [#allocation6], 1
    %595 = vsyncpa [#allocation9], 1
    %596 = vsyncpa [#allocation7], 1

</llo_original>
